<compile_context>
chip_gen: v5e
topology: v5e:2x2
jax: 0.10.0
libtpu: 0.0.40
codegen_flags: <defaults>
</compile_context>

<pallas_src>
import math
import numpy as np

import jax
import jax.numpy as jnp
from jax.experimental import pallas as pl
from jax.experimental.pallas import tpu as pltpu

NEG_MIN = float(np.finfo(np.float32).min)  # matches torch masked_fill(min of float32)


def _mha_head_kernel(q_ref, k_ref, v_ref, mask_ref,
                     wq_ref, bq_ref, wk_ref, bk_ref, wv_ref, bv_ref,
                     wo_ref, bo_ref,
                     out_ref, acc_ref):
    h = pl.program_id(2)
    num_heads = pl.num_programs(2)
    dk = wq_ref.shape[2]
    inv_sqrt_dk = 1.0 / math.sqrt(dk)

    @pl.when(h == 0)
    def _():
        acc_ref[...] = jnp.zeros_like(acc_ref)

    # bf16 operands feed the MXU at full rate; accumulate in f32.
    q_in = q_ref[0].astype(jnp.bfloat16)       # (tq, F)
    k_in = k_ref[0].astype(jnp.bfloat16)       # (T2, F)
    v_in = v_ref[0].astype(jnp.bfloat16)       # (T2, F)

    # Per-head projections: full-width K=F contraction, per-head N=Dk columns.
    qh = jnp.dot(q_in, wq_ref[0], preferred_element_type=jnp.float32) + bq_ref[0]
    kh = jnp.dot(k_in, wk_ref[0], preferred_element_type=jnp.float32) + bk_ref[0]
    vh = jnp.dot(v_in, wv_ref[0], preferred_element_type=jnp.float32) + bv_ref[0]

    # scores = qh @ kh^T / sqrt(dk)
    scores = jax.lax.dot_general(
        qh.astype(jnp.bfloat16), kh.astype(jnp.bfloat16),
        (((1,), (1,)), ((), ())),
        preferred_element_type=jnp.float32) * inv_sqrt_dk        # (tq, T2)

    mask_out = (mask_ref[0] == 0)                                # (Tm, T2), Tm in {1, tq}
    scores = jnp.where(mask_out, jnp.float32(NEG_MIN), scores)

    # Masked softmax over keys; exp + approx reciprocal live on the EUP slot.
    s_max = jnp.max(scores, axis=-1, keepdims=True)
    e = jnp.exp(scores - s_max)
    denom = jnp.sum(e, axis=-1, keepdims=True)
    attn = e * pl.reciprocal(denom, approx=True)
    attn = jnp.where(mask_out, jnp.float32(0.0), attn)
    # TODO(synk): dropout on the attention weights omitted (eval / rate=0 -> identity).

    xh = jnp.dot(attn.astype(jnp.bfloat16), vh.astype(jnp.bfloat16),
                 preferred_element_type=jnp.float32)             # (tq, Dk)

    # Per-head row-slab of the output projection, accumulated over the head axis.
    acc_ref[...] += jnp.dot(xh.astype(jnp.bfloat16), wo_ref[0],
                            preferred_element_type=jnp.float32)  # (tq, F)

    @pl.when(h == num_heads - 1)
    def _():
        out_ref[0] = acc_ref[...] + bo_ref[...]


def multi_headed_attention(query, key, value, mask, params, n_head):
    B, T1, F = query.shape
    T2 = key.shape[1]
    assert F % n_head == 0
    H = n_head
    dk = F // H

    # Query-axis tiling keeps the per-step working set bounded (mandatory for long
    # sequences on v7x's 64 MiB VMEM); for real models use tq=128+ and 128-multiple F.
    tq = T1 if T1 <= 128 else 128
    assert T1 % tq == 0, "time1 must be divisible by the query tile"
    n_qt = T1 // tq

    if mask is None:
        mask = jnp.ones((B, 1, T2), jnp.int32)
    mask = mask.astype(jnp.int32)
    mask_rows = mask.shape[1]            # 1 or T1
    tm = 1 if mask_rows == 1 else tq

    f32, bf16 = jnp.float32, jnp.bfloat16
    # Head-major weight layouts built host-side (free) so every BlockSpec is a
    # full-extent block; weights shipped as bf16 (halves weight DMA traffic).
    wq_h = params["wq"].reshape(F, H, dk).transpose(1, 0, 2).astype(bf16)   # (H, F, dk)
    wk_h = params["wk"].reshape(F, H, dk).transpose(1, 0, 2).astype(bf16)
    wv_h = params["wv"].reshape(F, H, dk).transpose(1, 0, 2).astype(bf16)
    wo_h = params["wo"].reshape(H, dk, F).astype(bf16)                      # (H, dk, F)
    bq_h = params["bq"].reshape(H, 1, dk).astype(f32)
    bk_h = params["bk"].reshape(H, 1, dk).astype(f32)
    bv_h = params["bv"].reshape(H, 1, dk).astype(f32)
    bo = params["bo"].reshape(1, F).astype(f32)

    def head_w(shape):
        return pl.BlockSpec(shape, lambda b, qi, h: (h, 0, 0))

    mask_map = (lambda b, qi, h: (b, 0, 0)) if mask_rows == 1 else (lambda b, qi, h: (b, qi, 0))

    in_specs = [
        pl.BlockSpec((1, tq, F), lambda b, qi, h: (b, qi, 0)),   # query tile
        pl.BlockSpec((1, T2, F), lambda b, qi, h: (b, 0, 0)),    # key (full)
        pl.BlockSpec((1, T2, F), lambda b, qi, h: (b, 0, 0)),    # value (full)
        pl.BlockSpec((1, tm, T2), mask_map),                     # mask
        head_w((1, F, dk)), head_w((1, 1, dk)),                  # wq, bq
        head_w((1, F, dk)), head_w((1, 1, dk)),                  # wk, bk
        head_w((1, F, dk)), head_w((1, 1, dk)),                  # wv, bv
        head_w((1, dk, F)),                                      # wo row-slab
        pl.BlockSpec((1, F), lambda b, qi, h: (0, 0)),           # bo
    ]
    out_spec = pl.BlockSpec((1, tq, F), lambda b, qi, h: (b, qi, 0))

    return pl.pallas_call(
        _mha_head_kernel,
        out_shape=jax.ShapeDtypeStruct((B, T1, F), jnp.float32),
        grid_spec=pltpu.PrefetchScalarGridSpec(
            num_scalar_prefetch=0,
            grid=(B, n_qt, H),
            in_specs=in_specs,
            out_specs=out_spec,
            scratch_shapes=[pltpu.VMEM((tq, F), jnp.float32)],
        ),
        compiler_params=pltpu.CompilerParams(
            dimension_semantics=("parallel", "parallel", "arbitrary"),
            vmem_limit_bytes=32 * 1024 * 1024,
        ),
    )(query.astype(f32), key.astype(f32), value.astype(f32), mask,
      wq_h, bq_h, wk_h, bk_h, wv_h, bv_h, wo_h, bo)


def _reference(query, key, value, mask, params, n_head):
    """Pure-JAX f32 transcription of the PyTorch forward (for verification)."""
    B, T1, F = query.shape
    T2 = key.shape[1]
    Dk = F // n_head
    q = (query @ params["wq"] + params["bq"]).reshape(B, T1, n_head, Dk).transpose(0, 2, 1, 3)
    k = (key @ params["wk"] + params["bk"]).reshape(B, T2, n_head, Dk).transpose(0, 2, 1, 3)
    v = (value @ params["wv"] + params["bv"]).reshape(B, T2, n_head, Dk).transpose(0, 2, 1, 3)
    scores = jnp.einsum("bhtd,bhsd->bhts", q, k) / math.sqrt(Dk)
    if mask is not None:
        m = (mask[:, None, :, :] == 0)
        scores = jnp.where(m, jnp.float32(NEG_MIN), scores)
        attn = jax.nn.softmax(scores, axis=-1)
        attn = jnp.where(m, 0.0, attn)
    else:
        attn = jax.nn.softmax(scores, axis=-1)
    x = jnp.einsum("bhts,bhsd->bhtd", attn, v).transpose(0, 2, 1, 3).reshape(B, T1, F)
    return x @ params["wo"] + params["bo"]


if __name__ == "__main__":
    B, T, F, H = 2, 8, 32, 4

    root = jax.random.PRNGKey(0)
    ks = jax.random.split(root, 12)

    def w(k, shape, scale=0.1):
        return (scale * jax.random.normal(k, shape)).astype(jnp.float32)

    params = dict(
        wq=w(ks[0], (F, F)), bq=w(ks[1], (F,)),
        wk=w(ks[2], (F, F)), bk=w(ks[3], (F,)),
        wv=w(ks[4], (F, F)), bv=w(ks[5], (F,)),
        wo=w(ks[6], (F, F)), bo=w(ks[7], (F,)),
    )

    query = w(ks[8], (B, T, F), 1.0)
    key_t = w(ks[9], (B, T, F), 1.0)
    value = w(ks[10], (B, T, F), 1.0)
    mask = jnp.ones((B, 1, T), jnp.int32).at[1, 0, T - 3:].set(0)

    out = multi_headed_attention(query, key_t, value, mask, params, n_head=H)
    out = jax.block_until_ready(out)

    ref = _reference(query, key_t, value, mask, params, H)
    assert out.shape == (B, T, F)
    # bf16 MXU operands + approx reciprocal -> compare against the f32 reference
    # with a bf16-appropriate tolerance.
    np.testing.assert_allclose(np.asarray(out), np.asarray(ref), rtol=3e-2, atol=3e-2)
    print("KERNEL_OK")
</pallas_src>

<mosaic_0001>
module attributes {stable_mosaic.version = 11 : i64} {
  func.func @_mha_head_kernel(%arg0: i32, %arg1: i32, %arg2: i32, %arg3: memref<1x8x32xf32, #tpu.memory_space<vmem>>, %arg4: memref<1x8x32xf32, #tpu.memory_space<vmem>>, %arg5: memref<1x8x32xf32, #tpu.memory_space<vmem>>, %arg6: memref<1x1x8xi32, #tpu.memory_space<vmem>>, %arg7: memref<1x32x8xbf16, #tpu.memory_space<vmem>>, %arg8: memref<1x1x8xf32, #tpu.memory_space<vmem>>, %arg9: memref<1x32x8xbf16, #tpu.memory_space<vmem>>, %arg10: memref<1x1x8xf32, #tpu.memory_space<vmem>>, %arg11: memref<1x32x8xbf16, #tpu.memory_space<vmem>>, %arg12: memref<1x1x8xf32, #tpu.memory_space<vmem>>, %arg13: memref<1x8x32xbf16, #tpu.memory_space<vmem>>, %arg14: memref<1x32xf32, #tpu.memory_space<vmem>>, %arg15: memref<1x8x32xf32, #tpu.memory_space<vmem>>, %arg16: memref<8x32xf32, #tpu.memory_space<vmem>>) attributes {dimension_semantics = [#tpu.dimension_semantics<parallel>, #tpu.dimension_semantics<parallel>, #tpu.dimension_semantics<arbitrary>], iteration_bounds = array<i64: 2, 1, 4>, scalar_prefetch = 0 : i64, scratch_operands = 1 : i64, tpu.core_type = #tpu.core_type<tc>, window_params = [{transform_indices = @transform_0, window_bounds = array<i64: 1, 8, 32>}, {transform_indices = @transform_1, window_bounds = array<i64: 1, 8, 32>}, {transform_indices = @transform_2, window_bounds = array<i64: 1, 8, 32>}, {transform_indices = @transform_3, window_bounds = array<i64: 1, 1, 8>}, {transform_indices = @transform_4, window_bounds = array<i64: 1, 32, 8>}, {transform_indices = @transform_5, window_bounds = array<i64: 1, 1, 8>}, {transform_indices = @transform_6, window_bounds = array<i64: 1, 32, 8>}, {transform_indices = @transform_7, window_bounds = array<i64: 1, 1, 8>}, {transform_indices = @transform_8, window_bounds = array<i64: 1, 32, 8>}, {transform_indices = @transform_9, window_bounds = array<i64: 1, 1, 8>}, {transform_indices = @transform_10, window_bounds = array<i64: 1, 8, 32>}, {pipeline_mode = #tpu.pipeline_mode<synchronous>, transform_indices = @transform_11, window_bounds = array<i64: 1, 32>}, {transform_indices = @transform_12, window_bounds = array<i64: 1, 8, 32>}]} {
    %c0_i32 = arith.constant 0 : i32
    %0 = arith.cmpi eq, %arg2, %c0_i32 : i32
    %1 = arith.extui %0 : i1 to i32
    %c0_i32_0 = arith.constant 0 : i32
    %2 = arith.cmpi ne, %1, %c0_i32_0 : i32
    scf.if %2 {
      %cst_49 = arith.constant 0.000000e+00 : f32
      %73 = vector.broadcast %cst_49 : f32 to vector<8x32xf32>
      %c0_50 = arith.constant 0 : index
      %c0_51 = arith.constant 0 : index
      %74 = vector.load %arg16[%c0_50, %c0_51] : memref<8x32xf32, #tpu.memory_space<vmem>>, vector<8x32xf32>
      tpu.vector_store %arg16[%c0_50, %c0_51], %73 {strides = array<i32>} : memref<8x32xf32, #tpu.memory_space<vmem>>, vector<8x32xf32>,
    } else {
    }
    %c0 = arith.constant 0 : index
    %c0_1 = arith.constant 0 : index
    %c0_2 = arith.constant 0 : index
    %3 = vector.load %arg3[%c0, %c0_1, %c0_2] : memref<1x8x32xf32, #tpu.memory_space<vmem>>, vector<1x8x32xf32>
    %4 = vector.shape_cast %3 : vector<1x8x32xf32> to vector<8x32xf32>
    %5 = arith.truncf %4 : vector<8x32xf32> to vector<8x32xbf16>
    %c0_3 = arith.constant 0 : index
    %c0_4 = arith.constant 0 : index
    %c0_5 = arith.constant 0 : index
    %6 = vector.load %arg4[%c0_3, %c0_4, %c0_5] : memref<1x8x32xf32, #tpu.memory_space<vmem>>, vector<1x8x32xf32>
    %7 = vector.shape_cast %6 : vector<1x8x32xf32> to vector<8x32xf32>
    %8 = arith.truncf %7 : vector<8x32xf32> to vector<8x32xbf16>
    %c0_6 = arith.constant 0 : index
    %c0_7 = arith.constant 0 : index
    %c0_8 = arith.constant 0 : index
    %9 = vector.load %arg5[%c0_6, %c0_7, %c0_8] : memref<1x8x32xf32, #tpu.memory_space<vmem>>, vector<1x8x32xf32>
    %10 = vector.shape_cast %9 : vector<1x8x32xf32> to vector<8x32xf32>
    %11 = arith.truncf %10 : vector<8x32xf32> to vector<8x32xbf16>
    %c0_9 = arith.constant 0 : index
    %c0_10 = arith.constant 0 : index
    %c0_11 = arith.constant 0 : index
    %12 = vector.load %arg7[%c0_9, %c0_10, %c0_11] : memref<1x32x8xbf16, #tpu.memory_space<vmem>>, vector<1x32x8xbf16>
    %13 = vector.shape_cast %12 : vector<1x32x8xbf16> to vector<32x8xbf16>
    %cst = arith.constant dense<0.000000e+00> : vector<8x8xf32>
    %14 = tpu.matmul %5, %13, %cst {dimension_numbers = #tpu.dot_dimension_numbers<[1], [0], [0], [1], [0, 0, 1, 1], [], []>} : vector<8x32xbf16>, vector<32x8xbf16>, vector<8x8xf32> -> vector<8x8xf32>
    %c0_12 = arith.constant 0 : index
    %c0_13 = arith.constant 0 : index
    %c0_14 = arith.constant 0 : index
    %15 = vector.load %arg8[%c0_12, %c0_13, %c0_14] : memref<1x1x8xf32, #tpu.memory_space<vmem>>, vector<1x1x8xf32>
    %16 = vector.shape_cast %15 : vector<1x1x8xf32> to vector<1x8xf32>
    %17 = vector.broadcast %16 : vector<1x8xf32> to vector<8x8xf32>
    %18 = arith.addf %14, %17 : vector<8x8xf32>
    %c0_15 = arith.constant 0 : index
    %c0_16 = arith.constant 0 : index
    %c0_17 = arith.constant 0 : index
    %19 = vector.load %arg9[%c0_15, %c0_16, %c0_17] : memref<1x32x8xbf16, #tpu.memory_space<vmem>>, vector<1x32x8xbf16>
    %20 = vector.shape_cast %19 : vector<1x32x8xbf16> to vector<32x8xbf16>
    %cst_18 = arith.constant dense<0.000000e+00> : vector<8x8xf32>
    %21 = tpu.matmul %8, %20, %cst_18 {dimension_numbers = #tpu.dot_dimension_numbers<[1], [0], [0], [1], [0, 0, 1, 1], [], []>} : vector<8x32xbf16>, vector<32x8xbf16>, vector<8x8xf32> -> vector<8x8xf32>
    %c0_19 = arith.constant 0 : index
    %c0_20 = arith.constant 0 : index
    %c0_21 = arith.constant 0 : index
    %22 = vector.load %arg10[%c0_19, %c0_20, %c0_21] : memref<1x1x8xf32, #tpu.memory_space<vmem>>, vector<1x1x8xf32>
    %23 = vector.shape_cast %22 : vector<1x1x8xf32> to vector<1x8xf32>
    %24 = vector.broadcast %23 : vector<1x8xf32> to vector<8x8xf32>
    %25 = arith.addf %21, %24 : vector<8x8xf32>
    %c0_22 = arith.constant 0 : index
    %c0_23 = arith.constant 0 : index
    %c0_24 = arith.constant 0 : index
    %26 = vector.load %arg11[%c0_22, %c0_23, %c0_24] : memref<1x32x8xbf16, #tpu.memory_space<vmem>>, vector<1x32x8xbf16>
    %27 = vector.shape_cast %26 : vector<1x32x8xbf16> to vector<32x8xbf16>
    %cst_25 = arith.constant dense<0.000000e+00> : vector<8x8xf32>
    %28 = tpu.matmul %11, %27, %cst_25 {dimension_numbers = #tpu.dot_dimension_numbers<[1], [0], [0], [1], [0, 0, 1, 1], [], []>} : vector<8x32xbf16>, vector<32x8xbf16>, vector<8x8xf32> -> vector<8x8xf32>
    %c0_26 = arith.constant 0 : index
    %c0_27 = arith.constant 0 : index
    %c0_28 = arith.constant 0 : index
    %29 = vector.load %arg12[%c0_26, %c0_27, %c0_28] : memref<1x1x8xf32, #tpu.memory_space<vmem>>, vector<1x1x8xf32>
    %30 = vector.shape_cast %29 : vector<1x1x8xf32> to vector<1x8xf32>
    %31 = vector.broadcast %30 : vector<1x8xf32> to vector<8x8xf32>
    %32 = arith.addf %28, %31 : vector<8x8xf32>
    %33 = arith.truncf %18 : vector<8x8xf32> to vector<8x8xbf16>
    %34 = arith.truncf %25 : vector<8x8xf32> to vector<8x8xbf16>
    %cst_29 = arith.constant dense<0.000000e+00> : vector<8x8xf32>
    %35 = tpu.matmul %33, %34, %cst_29 {dimension_numbers = #tpu.dot_dimension_numbers<[1], [1], [0], [0], [0, 0, 1, 0], [], []>} : vector<8x8xbf16>, vector<8x8xbf16>, vector<8x8xf32> -> vector<8x8xf32>
    %cst_30 = arith.constant 0.353553385 : f32
    %36 = vector.broadcast %cst_30 : f32 to vector<8x8xf32>
    %37 = arith.mulf %35, %36 : vector<8x8xf32>
    %c0_31 = arith.constant 0 : index
    %c0_32 = arith.constant 0 : index
    %c0_33 = arith.constant 0 : index
    %38 = vector.load %arg6[%c0_31, %c0_32, %c0_33] : memref<1x1x8xi32, #tpu.memory_space<vmem>>, vector<1x1x8xi32>
    %39 = vector.shape_cast %38 : vector<1x1x8xi32> to vector<1x8xi32>
    %c0_i32_34 = arith.constant 0 : i32
    %40 = vector.broadcast %c0_i32_34 : i32 to vector<1x8xi32>
    %41 = arith.cmpi eq, %39, %40 : vector<1x8xi32>
    %cst_35 = arith.constant -3.40282347E+38 : f32
    %42 = vector.shape_cast %41 : vector<1x8xi1> to vector<1x8xi1>
    %43 = vector.broadcast %42 : vector<1x8xi1> to vector<8x8xi1>
    %44 = vector.broadcast %cst_35 : f32 to vector<8x8xf32>
    %45 = arith.select %43, %44, %37 : vector<8x8xi1>, vector<8x8xf32>
    %cst_36 = arith.constant dense<0xFF800000> : vector<8xf32>
    %46 = vector.multi_reduction <maximumf>, %45, %cst_36 [1] : vector<8x8xf32> to vector<8xf32>
    %47 = vector.shape_cast %46 : vector<8xf32> to vector<8x1xf32>
    %48 = vector.broadcast %47 : vector<8x1xf32> to vector<8x8xf32>
    %49 = arith.subf %45, %48 : vector<8x8xf32>
    %50 = math.exp %49 : vector<8x8xf32>
    %cst_37 = arith.constant dense<0.000000e+00> : vector<8xf32>
    %51 = vector.multi_reduction <add>, %50, %cst_37 [1] : vector<8x8xf32> to vector<8xf32>
    %52 = vector.shape_cast %51 : vector<8xf32> to vector<8x1xf32>
    %53 = tpu.reciprocal %52 {approx = true} : vector<8x1xf32> -> vector<8x1xf32>
    %54 = vector.broadcast %53 : vector<8x1xf32> to vector<8x8xf32>
    %55 = arith.mulf %50, %54 : vector<8x8xf32>
    %cst_38 = arith.constant 0.000000e+00 : f32
    %56 = vector.shape_cast %41 : vector<1x8xi1> to vector<1x8xi1>
    %57 = vector.broadcast %56 : vector<1x8xi1> to vector<8x8xi1>
    %58 = vector.broadcast %cst_38 : f32 to vector<8x8xf32>
    %59 = arith.select %57, %58, %55 : vector<8x8xi1>, vector<8x8xf32>
    %60 = arith.truncf %59 : vector<8x8xf32> to vector<8x8xbf16>
    %61 = arith.truncf %32 : vector<8x8xf32> to vector<8x8xbf16>
    %cst_39 = arith.constant dense<0.000000e+00> : vector<8x8xf32>
    %62 = tpu.matmul %60, %61, %cst_39 {dimension_numbers = #tpu.dot_dimension_numbers<[1], [0], [0], [1], [0, 0, 1, 1], [], []>} : vector<8x8xbf16>, vector<8x8xbf16>, vector<8x8xf32> -> vector<8x8xf32>
    %c0_40 = arith.constant 0 : index
    %c0_41 = arith.constant 0 : index
    %63 = vector.load %arg16[%c0_40, %c0_41] : memref<8x32xf32, #tpu.memory_space<vmem>>, vector<8x32xf32>
    %64 = arith.truncf %62 : vector<8x8xf32> to vector<8x8xbf16>
    %c0_42 = arith.constant 0 : index
    %c0_43 = arith.constant 0 : index
    %c0_44 = arith.constant 0 : index
    %65 = vector.load %arg13[%c0_42, %c0_43, %c0_44] : memref<1x8x32xbf16, #tpu.memory_space<vmem>>, vector<1x8x32xbf16>
    %66 = vector.shape_cast %65 : vector<1x8x32xbf16> to vector<8x32xbf16>
    %cst_45 = arith.constant dense<0.000000e+00> : vector<8x32xf32>
    %67 = tpu.matmul %64, %66, %cst_45 {dimension_numbers = #tpu.dot_dimension_numbers<[1], [0], [0], [1], [0, 0, 1, 1], [], []>} : vector<8x8xbf16>, vector<8x32xbf16>, vector<8x32xf32> -> vector<8x32xf32>
    %68 = arith.addf %63, %67 : vector<8x32xf32>
    %c0_46 = arith.constant 0 : index
    %c0_47 = arith.constant 0 : index
    %69 = vector.load %arg16[%c0_46, %c0_47] : memref<8x32xf32, #tpu.memory_space<vmem>>, vector<8x32xf32>
    tpu.vector_store %arg16[%c0_46, %c0_47], %68 {strides = array<i32>} : memref<8x32xf32, #tpu.memory_space<vmem>>, vector<8x32xf32>,
    %c3_i32 = arith.constant 3 : i32
    %70 = arith.cmpi eq, %arg2, %c3_i32 : i32
    %71 = arith.extui %70 : i1 to i32
    %c0_i32_48 = arith.constant 0 : i32
    %72 = arith.cmpi ne, %71, %c0_i32_48 : i32
    scf.if %72 {
      %c0_49 = arith.constant 0 : index
      %c0_50 = arith.constant 0 : index
      %73 = vector.load %arg16[%c0_49, %c0_50] : memref<8x32xf32, #tpu.memory_space<vmem>>, vector<8x32xf32>
      %c0_51 = arith.constant 0 : index
      %c0_52 = arith.constant 0 : index
      %74 = vector.load %arg14[%c0_51, %c0_52] : memref<1x32xf32, #tpu.memory_space<vmem>>, vector<1x32xf32>
      %75 = vector.broadcast %74 : vector<1x32xf32> to vector<8x32xf32>
      %76 = arith.addf %73, %75 : vector<8x32xf32>
      %c0_53 = arith.constant 0 : index
      %c0_54 = arith.constant 0 : index
      %c0_55 = arith.constant 0 : index
      %77 = vector.load %arg15[%c0_53, %c0_54, %c0_55] : memref<1x8x32xf32, #tpu.memory_space<vmem>>, vector<1x8x32xf32>
      %78 = vector.shape_cast %77 : vector<1x8x32xf32> to vector<8x32xf32>
      %79 = vector.shape_cast %76 : vector<8x32xf32> to vector<1x8x32xf32>
      tpu.vector_store %arg15[%c0_53, %c0_54, %c0_55], %79 {strides = array<i32>} : memref<1x8x32xf32, #tpu.memory_space<vmem>>, vector<1x8x32xf32>,
    } else {
    }
    return
  }
  func.func @transform_0(%arg0: i32, %arg1: i32, %arg2: i32) -> (i32, i32, i32) {
    %c0_i32 = arith.constant 0 : i32
    %c0_i32_0 = arith.constant 0 : i32
    return %arg0, %arg1, %c0_i32 : i32, i32, i32
  }
  func.func @transform_1(%arg0: i32, %arg1: i32, %arg2: i32) -> (i32, i32, i32) {
    %c0_i32 = arith.constant 0 : i32
    %c0_i32_0 = arith.constant 0 : i32
    %c0_i32_1 = arith.constant 0 : i32
    return %arg0, %c0_i32, %c0_i32_0 : i32, i32, i32
  }
  func.func @transform_2(%arg0: i32, %arg1: i32, %arg2: i32) -> (i32, i32, i32) {
    %c0_i32 = arith.constant 0 : i32
    %c0_i32_0 = arith.constant 0 : i32
    %c0_i32_1 = arith.constant 0 : i32
    return %arg0, %c0_i32, %c0_i32_0 : i32, i32, i32
  }
  func.func @transform_3(%arg0: i32, %arg1: i32, %arg2: i32) -> (i32, i32, i32) {
    %c0_i32 = arith.constant 0 : i32
    %c0_i32_0 = arith.constant 0 : i32
    %c0_i32_1 = arith.constant 0 : i32
    return %arg0, %c0_i32, %c0_i32_0 : i32, i32, i32
  }
  func.func @transform_4(%arg0: i32, %arg1: i32, %arg2: i32) -> (i32, i32, i32) {
    %c0_i32 = arith.constant 0 : i32
    %c0_i32_0 = arith.constant 0 : i32
    %c0_i32_1 = arith.constant 0 : i32
    return %arg2, %c0_i32, %c0_i32_0 : i32, i32, i32
  }
  func.func @transform_5(%arg0: i32, %arg1: i32, %arg2: i32) -> (i32, i32, i32) {
    %c0_i32 = arith.constant 0 : i32
    %c0_i32_0 = arith.constant 0 : i32
    %c0_i32_1 = arith.constant 0 : i32
    return %arg2, %c0_i32, %c0_i32_0 : i32, i32, i32
  }
  func.func @transform_6(%arg0: i32, %arg1: i32, %arg2: i32) -> (i32, i32, i32) {
    %c0_i32 = arith.constant 0 : i32
    %c0_i32_0 = arith.constant 0 : i32
    %c0_i32_1 = arith.constant 0 : i32
    return %arg2, %c0_i32, %c0_i32_0 : i32, i32, i32
  }
  func.func @transform_7(%arg0: i32, %arg1: i32, %arg2: i32) -> (i32, i32, i32) {
    %c0_i32 = arith.constant 0 : i32
    %c0_i32_0 = arith.constant 0 : i32
    %c0_i32_1 = arith.constant 0 : i32
    return %arg2, %c0_i32, %c0_i32_0 : i32, i32, i32
  }
  func.func @transform_8(%arg0: i32, %arg1: i32, %arg2: i32) -> (i32, i32, i32) {
    %c0_i32 = arith.constant 0 : i32
    %c0_i32_0 = arith.constant 0 : i32
    %c0_i32_1 = arith.constant 0 : i32
    return %arg2, %c0_i32, %c0_i32_0 : i32, i32, i32
  }
  func.func @transform_9(%arg0: i32, %arg1: i32, %arg2: i32) -> (i32, i32, i32) {
    %c0_i32 = arith.constant 0 : i32
    %c0_i32_0 = arith.constant 0 : i32
    %c0_i32_1 = arith.constant 0 : i32
    return %arg2, %c0_i32, %c0_i32_0 : i32, i32, i32
  }
  func.func @transform_10(%arg0: i32, %arg1: i32, %arg2: i32) -> (i32, i32, i32) {
    %c0_i32 = arith.constant 0 : i32
    %c0_i32_0 = arith.constant 0 : i32
    %c0_i32_1 = arith.constant 0 : i32
    return %arg2, %c0_i32, %c0_i32_0 : i32, i32, i32
  }
  func.func @transform_11(%arg0: i32, %arg1: i32, %arg2: i32) -> (i32, i32) {
    %c0_i32 = arith.constant 0 : i32
    %c0_i32_0 = arith.constant 0 : i32
    %c0_i32_1 = arith.constant 0 : i32
    return %c0_i32, %c0_i32_0 : i32, i32
  }
  func.func @transform_12(%arg0: i32, %arg1: i32, %arg2: i32) -> (i32, i32, i32) {
    %c0_i32 = arith.constant 0 : i32
    %c0_i32_0 = arith.constant 0 : i32
    return %arg0, %arg1, %c0_i32 : i32, i32, i32
  }
}

</mosaic_0001>

<llo_original>
// kernel: tpu_custom_call.1
$region0: #{tpu_custom_call.1}
  #allocation0 [shape = 'u32[]', space=smem, size = 0x4, offset = 0x4, fixed_abs, tag = 'smem constant byte address 0x4 - core index']
  #allocation1 [shape = 'u32[72,128]{1,0:T(1,128)}', space=vmem, size = 0x9000, scoped, tag = 'internal scratch']
  #allocation2 [shape = 'f32[8,32]{1,0:T(8,128)}', space=vmem, size = 0x1000, scoped, tag = 'scratch operand']
  %s0 = inlined_call_operand.vmem [shape: f32[2,8,32], index: 0, kind: input, shape index: {}]
  %s1 = inlined_call_operand.vmem [shape: f32[2,8,32], index: 1, kind: input, shape index: {}]
  %s2 = inlined_call_operand.vmem [shape: f32[2,8,32], index: 2, kind: input, shape index: {}]
  %s3 = inlined_call_operand.vmem [shape: s32[2,1,8], index: 3, kind: input, shape index: {}]
  %s4 = inlined_call_operand.vmem [shape: bf16[4,32,8], index: 4, kind: input, shape index: {}]
  %s5 = inlined_call_operand.vmem [shape: f32[4,1,8], index: 5, kind: input, shape index: {}]
  %s6 = inlined_call_operand.vmem [shape: bf16[4,32,8], index: 6, kind: input, shape index: {}]
  %s7 = inlined_call_operand.vmem [shape: f32[4,1,8], index: 7, kind: input, shape index: {}]
  %s8 = inlined_call_operand.vmem [shape: bf16[4,32,8], index: 8, kind: input, shape index: {}]
  %s9 = inlined_call_operand.vmem [shape: f32[4,1,8], index: 9, kind: input, shape index: {}]
  %s10 = inlined_call_operand.vmem [shape: bf16[4,8,32], index: 10, kind: input, shape index: {}]
  %s11 = inlined_call_operand.vmem [shape: f32[1,32], index: 11, kind: input, shape index: {}]
  %s12 = inlined_call_operand.hbm [shape: f32[2,8,32], index: 12, kind: output, shape index: {}]
  %s13 = sld [smem:[#allocation0]]
  $region89: #{tpu_custom_call.1} parent=0
    _
  %s15 = ssub.s32 1, %s13
  %s16 = scalar_select 0, %s15, %s13
  $region1: #{tpu_custom_call.1} parent=0
    #allocation3 [shape = 'u8[8192]{0}', space=vmem, size = 0x2000, scoped, tag = 'output window, operand 0']
    #allocation4 [shape = 's32[2]{0}', space=sflag, size = 0x8, scoped, tag = 'scoped memory for tpu_custom_call.1']
    %17 = vsyncpa [#allocation4], 0
    %s18 = scalar_lea.sflag [#allocation4], 1
    %19 = vsyncpa %s18, 0
    loop: start=0, step=1, limit=10
    $region2: #{tpu_custom_call.1} parent=1 // loop_pre_header
      _
    $region3: #{tpu_custom_call.1} parent=1 // loop_header
      %s21 = sphi 0, %s25
      %p22 = scmp.ge.s32.totalorder %s21, 10
      %s28 = sphi 0, %s47
      %s29 = sphi 0, %s43
      %s30 = sphi 0, %s39
      %s31 = sphi 0, %s28
      %s32 = sphi 0, %s29
      %s33 = sphi 0, %s30
      %s34 = sphi 0, %s31
      %s35 = sphi 0, %s32
      %s36 = sphi 0, %s33
      %s52 = sphi 0, %s54
      %s55 = sphi 0, %s52
      %s56 = sphi 0, %s55
      %s72 = sphi 0, %s56
      %s78 = sphi 0, %s80
      %s81 = sphi 0, %s78
      %s82 = sphi 0, %s81
      %s98 = sphi 0, %s82
      %s104 = sphi 0, %s106
      %s107 = sphi 0, %s104
      %s108 = sphi 0, %s107
      %s124 = sphi 0, %s108
      %s130 = sphi 0, %s132
      %s133 = sphi 0, %s130
      %s134 = sphi 0, %s133
      %s150 = sphi 0, %s134
      %s156 = sphi 0, %s158
      %s159 = sphi 0, %s156
      %s160 = sphi 0, %s159
      %s176 = sphi 0, %s160
      %s182 = sphi 0, %s184
      %s185 = sphi 0, %s182
      %s186 = sphi 0, %s185
      %s202 = sphi 0, %s186
      %s208 = sphi 0, %s210
      %s211 = sphi 0, %s208
      %s212 = sphi 0, %s211
      %s228 = sphi 0, %s212
      %s234 = sphi 0, %s236
      %s237 = sphi 0, %s234
      %s238 = sphi 0, %s237
      %s254 = sphi 0, %s238
      %s260 = sphi 0, %s262
      %s263 = sphi 0, %s260
      %s264 = sphi 0, %s263
      %s280 = sphi 0, %s264
      %s286 = sphi 0, %s288
      %s289 = sphi 0, %s286
      %s290 = sphi 0, %s289
      %s306 = sphi 0, %s290
      %s312 = sphi 0, %s314
      %s315 = sphi 0, %s312
      %s316 = sphi 0, %s315
      %s332 = sphi 0, %s316
      %s336 = sphi 0, %s336
      %s338 = sphi 0, %s336
      %s339 = sphi 0, %s338
      %s353 = sphi 0, %s339
      %s361 = sphi 0, %s363
      %s364 = sphi 0, %s361
      %s365 = sphi 0, %s364
      %s381 = sphi 0, %s365
    $region4: #{tpu_custom_call.1} parent=1 // loop_header_branch
      %24 = sbr.rel (%p22) target = $region8
    $region5: #{tpu_custom_call.1} parent=1 // loop_body
      %s26 = ssub.s32 %s21, 1
      %s27 = ssub.s32 %s21, 2
      %s37 = sadd.s32 1, %s30
      %p38 = scmp.ge.s32.totalorder %s37, 4
      %s39 = scalar_select %p38, 0, %s37
      %s40 = sadd.s32 1, %s29
      %s41 = scalar_select %p38, %s40, %s29
      %p42 = scmp.ge.s32.totalorder %s41, 1
      %s43 = scalar_select %p42, 0, %s41
      %s44 = sadd.s32 1, %s28
      %s45 = scalar_select %p42, %s44, %s28
      %p46 = scmp.ge.s32.totalorder %s45, 2
      %s47 = scalar_select %p46, 0, %s45
      %s48 = ssub.s32 %s28, %s47
      %s49 = ssub.s32 %s29, %s43
      %s50 = sor.u32 %s48, %s49
      %p51 = scmp.eq.s32.totalorder %s50, 0
      %s53 = sadd.s32 %s52, 1
      %s54 = scalar_select %p51, %s52, %s53
      %p57 = pneg %p51
      %p58 = scmp.eq.s32.totalorder %s21, 7
      %p59 = por %p57, %p58
      %p60 = scmp.ne.s32.totalorder %s52, %s55
      %p61 = scmp.eq.s32.totalorder %s21, 0
      %p62 = por %p60, %p61
      %p63 = scmp.ne.s32.totalorder %s52, %s55
      %p64 = scmp.eq.s32.totalorder %s26, 7
      %p65 = por %p63, %p64
      %p66 = scmp.ne.s32.totalorder %s55, %s56
      %p67 = scmp.eq.s32.totalorder %s26, 0
      %p68 = por %p66, %p67
      %p69 = scmp.ne.s32.totalorder %s55, %s56
      %p70 = scmp.eq.s32.totalorder %s27, 7
      %p71 = por %p69, %p70
      %p73 = scmp.ne.s32.totalorder %s56, %s72
      %p74 = scmp.eq.s32.totalorder %s27, 0
      %p75 = por %p73, %p74
      %s76 = ssub.s32 %s28, %s47
      %p77 = scmp.eq.s32.totalorder %s76, 0
      %s79 = sadd.s32 %s78, 1
      %s80 = scalar_select %p77, %s78, %s79
      %p83 = pneg %p77
      %p84 = scmp.eq.s32.totalorder %s21, 7
      %p85 = por %p83, %p84
      %p86 = scmp.ne.s32.totalorder %s78, %s81
      %p87 = scmp.eq.s32.totalorder %s21, 0
      %p88 = por %p86, %p87
      %p89 = scmp.ne.s32.totalorder %s78, %s81
      %p90 = scmp.eq.s32.totalorder %s26, 7
      %p91 = por %p89, %p90
      %p92 = scmp.ne.s32.totalorder %s81, %s82
      %p93 = scmp.eq.s32.totalorder %s26, 0
      %p94 = por %p92, %p93
      %p95 = scmp.ne.s32.totalorder %s81, %s82
      %p96 = scmp.eq.s32.totalorder %s27, 7
      %p97 = por %p95, %p96
      %p99 = scmp.ne.s32.totalorder %s82, %s98
      %p100 = scmp.eq.s32.totalorder %s27, 0
      %p101 = por %p99, %p100
      %s102 = ssub.s32 %s28, %s47
      %p103 = scmp.eq.s32.totalorder %s102, 0
      %s105 = sadd.s32 %s104, 1
      %s106 = scalar_select %p103, %s104, %s105
      %p109 = pneg %p103
      %p110 = scmp.eq.s32.totalorder %s21, 7
      %p111 = por %p109, %p110
      %p112 = scmp.ne.s32.totalorder %s104, %s107
      %p113 = scmp.eq.s32.totalorder %s21, 0
      %p114 = por %p112, %p113
      %p115 = scmp.ne.s32.totalorder %s104, %s107
      %p116 = scmp.eq.s32.totalorder %s26, 7
      %p117 = por %p115, %p116
      %p118 = scmp.ne.s32.totalorder %s107, %s108
      %p119 = scmp.eq.s32.totalorder %s26, 0
      %p120 = por %p118, %p119
      %p121 = scmp.ne.s32.totalorder %s107, %s108
      %p122 = scmp.eq.s32.totalorder %s27, 7
      %p123 = por %p121, %p122
      %p125 = scmp.ne.s32.totalorder %s108, %s124
      %p126 = scmp.eq.s32.totalorder %s27, 0
      %p127 = por %p125, %p126
      %s128 = ssub.s32 %s28, %s47
      %p129 = scmp.eq.s32.totalorder %s128, 0
      %s131 = sadd.s32 %s130, 1
      %s132 = scalar_select %p129, %s130, %s131
      %p135 = pneg %p129
      %p136 = scmp.eq.s32.totalorder %s21, 7
      %p137 = por %p135, %p136
      %p138 = scmp.ne.s32.totalorder %s130, %s133
      %p139 = scmp.eq.s32.totalorder %s21, 0
      %p140 = por %p138, %p139
      %p141 = scmp.ne.s32.totalorder %s130, %s133
      %p142 = scmp.eq.s32.totalorder %s26, 7
      %p143 = por %p141, %p142
      %p144 = scmp.ne.s32.totalorder %s133, %s134
      %p145 = scmp.eq.s32.totalorder %s26, 0
      %p146 = por %p144, %p145
      %p147 = scmp.ne.s32.totalorder %s133, %s134
      %p148 = scmp.eq.s32.totalorder %s27, 7
      %p149 = por %p147, %p148
      %p151 = scmp.ne.s32.totalorder %s134, %s150
      %p152 = scmp.eq.s32.totalorder %s27, 0
      %p153 = por %p151, %p152
      %s154 = ssub.s32 %s30, %s39
      %p155 = scmp.eq.s32.totalorder %s154, 0
      %s157 = sadd.s32 %s156, 1
      %s158 = scalar_select %p155, %s156, %s157
      %p161 = pneg %p155
      %p162 = scmp.eq.s32.totalorder %s21, 7
      %p163 = por %p161, %p162
      %p164 = scmp.ne.s32.totalorder %s156, %s159
      %p165 = scmp.eq.s32.totalorder %s21, 0
      %p166 = por %p164, %p165
      %p167 = scmp.ne.s32.totalorder %s156, %s159
      %p168 = scmp.eq.s32.totalorder %s26, 7
      %p169 = por %p167, %p168
      %p170 = scmp.ne.s32.totalorder %s159, %s160
      %p171 = scmp.eq.s32.totalorder %s26, 0
      %p172 = por %p170, %p171
      %p173 = scmp.ne.s32.totalorder %s159, %s160
      %p174 = scmp.eq.s32.totalorder %s27, 7
      %p175 = por %p173, %p174
      %p177 = scmp.ne.s32.totalorder %s160, %s176
      %p178 = scmp.eq.s32.totalorder %s27, 0
      %p179 = por %p177, %p178
      %s180 = ssub.s32 %s30, %s39
      %p181 = scmp.eq.s32.totalorder %s180, 0
      %s183 = sadd.s32 %s182, 1
      %s184 = scalar_select %p181, %s182, %s183
      %p187 = pneg %p181
      %p188 = scmp.eq.s32.totalorder %s21, 7
      %p189 = por %p187, %p188
      %p190 = scmp.ne.s32.totalorder %s182, %s185
      %p191 = scmp.eq.s32.totalorder %s21, 0
      %p192 = por %p190, %p191
      %p193 = scmp.ne.s32.totalorder %s182, %s185
      %p194 = scmp.eq.s32.totalorder %s26, 7
      %p195 = por %p193, %p194
      %p196 = scmp.ne.s32.totalorder %s185, %s186
      %p197 = scmp.eq.s32.totalorder %s26, 0
      %p198 = por %p196, %p197
      %p199 = scmp.ne.s32.totalorder %s185, %s186
      %p200 = scmp.eq.s32.totalorder %s27, 7
      %p201 = por %p199, %p200
      %p203 = scmp.ne.s32.totalorder %s186, %s202
      %p204 = scmp.eq.s32.totalorder %s27, 0
      %p205 = por %p203, %p204
      %s206 = ssub.s32 %s30, %s39
      %p207 = scmp.eq.s32.totalorder %s206, 0
      %s209 = sadd.s32 %s208, 1
      %s210 = scalar_select %p207, %s208, %s209
      %p213 = pneg %p207
      %p214 = scmp.eq.s32.totalorder %s21, 7
      %p215 = por %p213, %p214
      %p216 = scmp.ne.s32.totalorder %s208, %s211
      %p217 = scmp.eq.s32.totalorder %s21, 0
      %p218 = por %p216, %p217
      %p219 = scmp.ne.s32.totalorder %s208, %s211
      %p220 = scmp.eq.s32.totalorder %s26, 7
      %p221 = por %p219, %p220
      %p222 = scmp.ne.s32.totalorder %s211, %s212
      %p223 = scmp.eq.s32.totalorder %s26, 0
      %p224 = por %p222, %p223
      %p225 = scmp.ne.s32.totalorder %s211, %s212
      %p226 = scmp.eq.s32.totalorder %s27, 7
      %p227 = por %p225, %p226
      %p229 = scmp.ne.s32.totalorder %s212, %s228
      %p230 = scmp.eq.s32.totalorder %s27, 0
      %p231 = por %p229, %p230
      %s232 = ssub.s32 %s30, %s39
      %p233 = scmp.eq.s32.totalorder %s232, 0
      %s235 = sadd.s32 %s234, 1
      %s236 = scalar_select %p233, %s234, %s235
      %p239 = pneg %p233
      %p240 = scmp.eq.s32.totalorder %s21, 7
      %p241 = por %p239, %p240
      %p242 = scmp.ne.s32.totalorder %s234, %s237
      %p243 = scmp.eq.s32.totalorder %s21, 0
      %p244 = por %p242, %p243
      %p245 = scmp.ne.s32.totalorder %s234, %s237
      %p246 = scmp.eq.s32.totalorder %s26, 7
      %p247 = por %p245, %p246
      %p248 = scmp.ne.s32.totalorder %s237, %s238
      %p249 = scmp.eq.s32.totalorder %s26, 0
      %p250 = por %p248, %p249
      %p251 = scmp.ne.s32.totalorder %s237, %s238
      %p252 = scmp.eq.s32.totalorder %s27, 7
      %p253 = por %p251, %p252
      %p255 = scmp.ne.s32.totalorder %s238, %s254
      %p256 = scmp.eq.s32.totalorder %s27, 0
      %p257 = por %p255, %p256
      %s258 = ssub.s32 %s30, %s39
      %p259 = scmp.eq.s32.totalorder %s258, 0
      %s261 = sadd.s32 %s260, 1
      %s262 = scalar_select %p259, %s260, %s261
      %p265 = pneg %p259
      %p266 = scmp.eq.s32.totalorder %s21, 7
      %p267 = por %p265, %p266
      %p268 = scmp.ne.s32.totalorder %s260, %s263
      %p269 = scmp.eq.s32.totalorder %s21, 0
      %p270 = por %p268, %p269
      %p271 = scmp.ne.s32.totalorder %s260, %s263
      %p272 = scmp.eq.s32.totalorder %s26, 7
      %p273 = por %p271, %p272
      %p274 = scmp.ne.s32.totalorder %s263, %s264
      %p275 = scmp.eq.s32.totalorder %s26, 0
      %p276 = por %p274, %p275
      %p277 = scmp.ne.s32.totalorder %s263, %s264
      %p278 = scmp.eq.s32.totalorder %s27, 7
      %p279 = por %p277, %p278
      %p281 = scmp.ne.s32.totalorder %s264, %s280
      %p282 = scmp.eq.s32.totalorder %s27, 0
      %p283 = por %p281, %p282
      %s284 = ssub.s32 %s30, %s39
      %p285 = scmp.eq.s32.totalorder %s284, 0
      %s287 = sadd.s32 %s286, 1
      %s288 = scalar_select %p285, %s286, %s287
      %p291 = pneg %p285
      %p292 = scmp.eq.s32.totalorder %s21, 7
      %p293 = por %p291, %p292
      %p294 = scmp.ne.s32.totalorder %s286, %s289
      %p295 = scmp.eq.s32.totalorder %s21, 0
      %p296 = por %p294, %p295
      %p297 = scmp.ne.s32.totalorder %s286, %s289
      %p298 = scmp.eq.s32.totalorder %s26, 7
      %p299 = por %p297, %p298
      %p300 = scmp.ne.s32.totalorder %s289, %s290
      %p301 = scmp.eq.s32.totalorder %s26, 0
      %p302 = por %p300, %p301
      %p303 = scmp.ne.s32.totalorder %s289, %s290
      %p304 = scmp.eq.s32.totalorder %s27, 7
      %p305 = por %p303, %p304
      %p307 = scmp.ne.s32.totalorder %s290, %s306
      %p308 = scmp.eq.s32.totalorder %s27, 0
      %p309 = por %p307, %p308
      %s310 = ssub.s32 %s30, %s39
      %p311 = scmp.eq.s32.totalorder %s310, 0
      %s313 = sadd.s32 %s312, 1
      %s314 = scalar_select %p311, %s312, %s313
      %p317 = pneg %p311
      %p318 = scmp.eq.s32.totalorder %s21, 7
      %p319 = por %p317, %p318
      %p320 = scmp.ne.s32.totalorder %s312, %s315
      %p321 = scmp.eq.s32.totalorder %s21, 0
      %p322 = por %p320, %p321
      %p323 = scmp.ne.s32.totalorder %s312, %s315
      %p324 = scmp.eq.s32.totalorder %s26, 7
      %p325 = por %p323, %p324
      %p326 = scmp.ne.s32.totalorder %s315, %s316
      %p327 = scmp.eq.s32.totalorder %s26, 0
      %p328 = por %p326, %p327
      %p329 = scmp.ne.s32.totalorder %s315, %s316
      %p330 = scmp.eq.s32.totalorder %s27, 7
      %p331 = por %p329, %p330
      %p333 = scmp.ne.s32.totalorder %s316, %s332
      %p334 = scmp.eq.s32.totalorder %s27, 0
      %p335 = por %p333, %p334
      %s337 = sadd.s32 %s336, 1
      %p340 = scmp.eq.s32.totalorder %s21, 7
      %p341 = scmp.ne.s32.totalorder %s336, %s338
      %p342 = scmp.eq.s32.totalorder %s21, 0
      %p343 = por %p341, %p342
      %p344 = scmp.ne.s32.totalorder %s336, %s338
      %p345 = scmp.eq.s32.totalorder %s26, 7
      %p346 = por %p344, %p345
      %p347 = scmp.ne.s32.totalorder %s338, %s339
      %p348 = scmp.eq.s32.totalorder %s26, 0
      %p349 = por %p347, %p348
      %p350 = scmp.ne.s32.totalorder %s338, %s339
      %p351 = scmp.eq.s32.totalorder %s27, 7
      %p352 = por %p350, %p351
      %p354 = scmp.ne.s32.totalorder %s339, %s353
      %p355 = scmp.eq.s32.totalorder %s27, 0
      %p356 = por %p354, %p355
      %s357 = ssub.s32 %s28, %s47
      %s358 = ssub.s32 %s29, %s43
      %s359 = sor.u32 %s357, %s358
      %p360 = scmp.eq.s32.totalorder %s359, 0
      %s362 = sadd.s32 %s361, 1
      %s363 = scalar_select %p360, %s361, %s362
      %p366 = pneg %p360
      %p367 = scmp.eq.s32.totalorder %s21, 7
      %p368 = por %p366, %p367
      %p369 = scmp.ne.s32.totalorder %s361, %s364
      %p370 = scmp.eq.s32.totalorder %s21, 0
      %p371 = por %p369, %p370
      %p372 = scmp.ne.s32.totalorder %s361, %s364
      %p373 = scmp.eq.s32.totalorder %s26, 7
      %p374 = por %p372, %p373
      %p375 = scmp.ne.s32.totalorder %s364, %s365
      %p376 = scmp.eq.s32.totalorder %s26, 0
      %p377 = por %p375, %p376
      %p378 = scmp.ne.s32.totalorder %s364, %s365
      %p379 = scmp.eq.s32.totalorder %s27, 7
      %p380 = por %p378, %p379
      %p382 = scmp.ne.s32.totalorder %s365, %s381
      %p383 = scmp.eq.s32.totalorder %s27, 0
      %p384 = por %p382, %p383
      %p385 = scmp.le.s32.totalorder 1, %s21
      %p386 = scmp.lt.s32.totalorder %s21, 9
      %p387 = pnand %p385, %p386
      %p388 = pneg %p387
      // Predicated region
      $region9: #{tpu_custom_call.1} parent=5 // pred_check
        _
      $region10: #{tpu_custom_call.1} parent=5 // pred_check_branch
        %390 = sbr.rel (%p387) target = $region12
      $region11: #{tpu_custom_call.1} parent=5 // pred_region
        %s391 = ssub.s32 %s21, 1
        // Predicated region
        $region13: #{tpu_custom_call.1} parent=11 // pred_check
          %p392 = pneg %p349
        $region14: #{tpu_custom_call.1} parent=11 // pred_check_branch
          %394 = sbr.rel (%p392) target = $region16
        $region15: #{tpu_custom_call.1} parent=11 // pred_region
          _
        $region16: #{tpu_custom_call.1} parent=11 // pred_fallthru
          _
      $region12: #{tpu_custom_call.1} parent=5 // pred_fallthru
        _
      %p395 = scmp.lt.s32.totalorder %s21, 8
      // Predicated region
      $region17: #{tpu_custom_call.1} parent=5 // pred_check
        %p396 = pneg %p395
      $region18: #{tpu_custom_call.1} parent=5 // pred_check_branch
        %398 = sbr.rel (%p396) target = $region20
      $region19: #{tpu_custom_call.1} parent=5 // pred_region
        // Predicated region
        $region21: #{tpu_custom_call.1} parent=19 // pred_check
          %p399 = pneg %p62
        $region22: #{tpu_custom_call.1} parent=19 // pred_check_branch
          %401 = sbr.rel (%p399) target = $region24
        $region23: #{tpu_custom_call.1} parent=19 // pred_region
          %p402 = scmp.lt.s32.totalorder %s28, 1
          %s403 = scalar_select %p402, %s28, 1
          %p404 = scmp.lt.s32.totalorder %s29, 0
          %s405 = scalar_select %p404, %s29, 0
          %s406 = sadd.s32 %s405, %s403
          %s407 = smul.addr %s406, 8
          %s408 = scalar_lea.vmem %s0, %s407
        $region24: #{tpu_custom_call.1} parent=19 // pred_fallthru
          _
        // Predicated region
        $region25: #{tpu_custom_call.1} parent=19 // pred_check
          %p409 = pneg %p88
        $region26: #{tpu_custom_call.1} parent=19 // pred_check_branch
          %411 = sbr.rel (%p409) target = $region28
        $region27: #{tpu_custom_call.1} parent=19 // pred_region
          %p412 = scmp.lt.s32.totalorder %s28, 1
          %s413 = scalar_select %p412, %s28, 1
          %s414 = smul.addr %s413, 8
          %s415 = scalar_lea.vmem %s1, %s414
        $region28: #{tpu_custom_call.1} parent=19 // pred_fallthru
          _
        // Predicated region
        $region29: #{tpu_custom_call.1} parent=19 // pred_check
          %p416 = pneg %p114
        $region30: #{tpu_custom_call.1} parent=19 // pred_check_branch
          %418 = sbr.rel (%p416) target = $region32
        $region31: #{tpu_custom_call.1} parent=19 // pred_region
          %p419 = scmp.lt.s32.totalorder %s28, 1
          %s420 = scalar_select %p419, %s28, 1
          %s421 = smul.addr %s420, 8
          %s422 = scalar_lea.vmem %s2, %s421
        $region32: #{tpu_custom_call.1} parent=19 // pred_fallthru
          _
        // Predicated region
        $region33: #{tpu_custom_call.1} parent=19 // pred_check
          %p423 = pneg %p140
        $region34: #{tpu_custom_call.1} parent=19 // pred_check_branch
          %425 = sbr.rel (%p423) target = $region36
        $region35: #{tpu_custom_call.1} parent=19 // pred_region
          %p426 = scmp.lt.s32.totalorder %s28, 1
          %s427 = scalar_select %p426, %s28, 1
          %s428 = scalar_lea.vmem %s3, %s427
        $region36: #{tpu_custom_call.1} parent=19 // pred_fallthru
          _
        // Predicated region
        $region37: #{tpu_custom_call.1} parent=19 // pred_check
          %p429 = pneg %p166
        $region38: #{tpu_custom_call.1} parent=19 // pred_check_branch
          %431 = sbr.rel (%p429) target = $region40
        $region39: #{tpu_custom_call.1} parent=19 // pred_region
          %p432 = scmp.lt.s32.totalorder %s30, 3
          %s433 = scalar_select %p432, %s30, 3
          %s434 = smul.addr %s433, 4
          %s435 = smul.addr %s434, 4
          %s436 = scalar_lea.vmem %s4, %s435
        $region40: #{tpu_custom_call.1} parent=19 // pred_fallthru
          _
        // Predicated region
        $region41: #{tpu_custom_call.1} parent=19 // pred_check
          %p437 = pneg %p192
        $region42: #{tpu_custom_call.1} parent=19 // pred_check_branch
          %439 = sbr.rel (%p437) target = $region44
        $region43: #{tpu_custom_call.1} parent=19 // pred_region
          %p440 = scmp.lt.s32.totalorder %s30, 3
          %s441 = scalar_select %p440, %s30, 3
          %s442 = scalar_lea.vmem %s5, %s441
        $region44: #{tpu_custom_call.1} parent=19 // pred_fallthru
          _
        // Predicated region
        $region45: #{tpu_custom_call.1} parent=19 // pred_check
          %p443 = pneg %p218
        $region46: #{tpu_custom_call.1} parent=19 // pred_check_branch
          %445 = sbr.rel (%p443) target = $region48
        $region47: #{tpu_custom_call.1} parent=19 // pred_region
          %p446 = scmp.lt.s32.totalorder %s30, 3
          %s447 = scalar_select %p446, %s30, 3
          %s448 = smul.addr %s447, 4
          %s449 = smul.addr %s448, 4
          %s450 = scalar_lea.vmem %s6, %s449
        $region48: #{tpu_custom_call.1} parent=19 // pred_fallthru
          _
        // Predicated region
        $region49: #{tpu_custom_call.1} parent=19 // pred_check
          %p451 = pneg %p244
        $region50: #{tpu_custom_call.1} parent=19 // pred_check_branch
          %453 = sbr.rel (%p451) target = $region52
        $region51: #{tpu_custom_call.1} parent=19 // pred_region
          %p454 = scmp.lt.s32.totalorder %s30, 3
          %s455 = scalar_select %p454, %s30, 3
          %s456 = scalar_lea.vmem %s7, %s455
        $region52: #{tpu_custom_call.1} parent=19 // pred_fallthru
          _
        // Predicated region
        $region53: #{tpu_custom_call.1} parent=19 // pred_check
          %p457 = pneg %p270
        $region54: #{tpu_custom_call.1} parent=19 // pred_check_branch
          %459 = sbr.rel (%p457) target = $region56
        $region55: #{tpu_custom_call.1} parent=19 // pred_region
          %p460 = scmp.lt.s32.totalorder %s30, 3
          %s461 = scalar_select %p460, %s30, 3
          %s462 = smul.addr %s461, 4
          %s463 = smul.addr %s462, 4
          %s464 = scalar_lea.vmem %s8, %s463
        $region56: #{tpu_custom_call.1} parent=19 // pred_fallthru
          _
        // Predicated region
        $region57: #{tpu_custom_call.1} parent=19 // pred_check
          %p465 = pneg %p296
        $region58: #{tpu_custom_call.1} parent=19 // pred_check_branch
          %467 = sbr.rel (%p465) target = $region60
        $region59: #{tpu_custom_call.1} parent=19 // pred_region
          %p468 = scmp.lt.s32.totalorder %s30, 3
          %s469 = scalar_select %p468, %s30, 3
          %s470 = scalar_lea.vmem %s9, %s469
        $region60: #{tpu_custom_call.1} parent=19 // pred_fallthru
          _
        // Predicated region
        $region61: #{tpu_custom_call.1} parent=19 // pred_check
          %p471 = pneg %p322
        $region62: #{tpu_custom_call.1} parent=19 // pred_check_branch
          %473 = sbr.rel (%p471) target = $region64
        $region63: #{tpu_custom_call.1} parent=19 // pred_region
          %p474 = scmp.lt.s32.totalorder %s30, 3
          %s475 = scalar_select %p474, %s30, 3
          %s476 = smul.addr %s475, 4
          %s477 = scalar_lea.vmem %s10, %s476
        $region64: #{tpu_custom_call.1} parent=19 // pred_fallthru
          _
      $region20: #{tpu_custom_call.1} parent=5 // pred_fallthru
        _
      %p478 = scmp.le.s32.totalorder 1, %s21
      %p479 = scmp.lt.s32.totalorder %s21, 9
      %p480 = pnand %p478, %p479
      %p481 = pneg %p480
      // Predicated region
      $region65: #{tpu_custom_call.1} parent=5 // pred_check
        _
      $region66: #{tpu_custom_call.1} parent=5 // pred_check_branch
        %483 = sbr.rel (%p480) target = $region68
      $region67: #{tpu_custom_call.1} parent=5 // pred_region
        %s484 = ssub.s32 %s21, 1
        %p485 = scmp.lt.s32.totalorder %s31, 1
        %s486 = scalar_select %p485, %s31, 1
        %p487 = scmp.lt.s32.totalorder %s32, 0
        %s488 = scalar_select %p487, %s32, 0
        %s489 = sadd.s32 %s488, %s486
        %s490 = smul.addr %s489, 8
        %s491 = scalar_lea.vmem %s0, %s490
        %p492 = pneg %p68
        %p493 = pneg %p65
        %p494 = scmp.lt.s32.totalorder %s31, 1
        %s495 = scalar_select %p494, %s31, 1
        %s496 = smul.addr %s495, 8
        %s497 = scalar_lea.vmem %s1, %s496
        %p498 = pneg %p94
        %p499 = pneg %p91
        %p500 = scmp.lt.s32.totalorder %s31, 1
        %s501 = scalar_select %p500, %s31, 1
        %s502 = smul.addr %s501, 8
        %s503 = scalar_lea.vmem %s2, %s502
        %p504 = pneg %p120
        %p505 = pneg %p117
        %p506 = scmp.lt.s32.totalorder %s31, 1
        %s507 = scalar_select %p506, %s31, 1
        %s508 = scalar_lea.vmem %s3, %s507
        %p509 = pneg %p146
        %p510 = pneg %p143
        %p511 = scmp.lt.s32.totalorder %s33, 3
        %s512 = scalar_select %p511, %s33, 3
        %s513 = smul.addr %s512, 4
        %s514 = smul.addr %s513, 4
        %s515 = scalar_lea.vmem %s4, %s514
        %p516 = pneg %p172
        %p517 = pneg %p169
        %p518 = scmp.lt.s32.totalorder %s33, 3
        %s519 = scalar_select %p518, %s33, 3
        %s520 = scalar_lea.vmem %s5, %s519
        %p521 = pneg %p198
        %p522 = pneg %p195
        %p523 = scmp.lt.s32.totalorder %s33, 3
        %s524 = scalar_select %p523, %s33, 3
        %s525 = smul.addr %s524, 4
        %s526 = smul.addr %s525, 4
        %s527 = scalar_lea.vmem %s6, %s526
        %p528 = pneg %p224
        %p529 = pneg %p221
        %p530 = scmp.lt.s32.totalorder %s33, 3
        %s531 = scalar_select %p530, %s33, 3
        %s532 = scalar_lea.vmem %s7, %s531
        %p533 = pneg %p250
        %p534 = pneg %p247
        %p535 = scmp.lt.s32.totalorder %s33, 3
        %s536 = scalar_select %p535, %s33, 3
        %s537 = smul.addr %s536, 4
        %s538 = smul.addr %s537, 4
        %s539 = scalar_lea.vmem %s8, %s538
        %p540 = pneg %p276
        %p541 = pneg %p273
        %p542 = scmp.lt.s32.totalorder %s33, 3
        %s543 = scalar_select %p542, %s33, 3
        %s544 = scalar_lea.vmem %s9, %s543
        %p545 = pneg %p302
        %p546 = pneg %p299
        %p547 = scmp.lt.s32.totalorder %s33, 3
        %s548 = scalar_select %p547, %s33, 3
        %s549 = smul.addr %s548, 4
        %s550 = scalar_lea.vmem %s10, %s549
        %p551 = pneg %p328
        %p552 = pneg %p325
        %p553 = pneg %p349
        %p554 = pneg %p346
        %p555 = pneg %p377
        %p556 = pneg %p374
        %s557 = sand.u32 %s364, 1
        %s558 = scalar_lea.sflag [#allocation4], %s557
        %s559 = sand.u32 %s364, 1
        %s560 = smul.addr %s559, 8
        %s561 = scalar_lea.vmem [#allocation3], %s560
        %p562 = scmp.lt.s32.totalorder %s31, 1
        %s563 = scalar_select %p562, %s31, 1
        %p564 = scmp.lt.s32.totalorder %s32, 0
        %s565 = scalar_select %p564, %s32, 0
        %s566 = sadd.s32 %s565, %s563
        %s567 = smul.addr %s566, 8
        %s568 = scalar_lea.vmem %s0, %s567
        %p569 = scmp.lt.s32.totalorder %s31, 1
        %s570 = scalar_select %p569, %s31, 1
        %s571 = smul.addr %s570, 8
        %s572 = scalar_lea.vmem %s1, %s571
        %p573 = scmp.lt.s32.totalorder %s31, 1
        %s574 = scalar_select %p573, %s31, 1
        %s575 = smul.addr %s574, 8
        %s576 = scalar_lea.vmem %s2, %s575
        %p577 = scmp.lt.s32.totalorder %s31, 1
        %s578 = scalar_select %p577, %s31, 1
        %s579 = scalar_lea.vmem %s3, %s578
        %p580 = scmp.lt.s32.totalorder %s33, 3
        %s581 = scalar_select %p580, %s33, 3
        %s582 = smul.addr %s581, 4
        %s583 = smul.addr %s582, 4
        %s584 = scalar_lea.vmem %s4, %s583
        %p585 = scmp.lt.s32.totalorder %s33, 3
        %s586 = scalar_select %p585, %s33, 3
        %s587 = scalar_lea.vmem %s5, %s586
        %p588 = scmp.lt.s32.totalorder %s33, 3
        %s589 = scalar_select %p588, %s33, 3
        %s590 = smul.addr %s589, 4
        %s591 = smul.addr %s590, 4
        %s592 = scalar_lea.vmem %s6, %s591
        %p593 = scmp.lt.s32.totalorder %s33, 3
        %s594 = scalar_select %p593, %s33, 3
        %s595 = scalar_lea.vmem %s7, %s594
        %p596 = scmp.lt.s32.totalorder %s33, 3
        %s597 = scalar_select %p596, %s33, 3
        %s598 = smul.addr %s597, 4
        %s599 = smul.addr %s598, 4
        %s600 = scalar_lea.vmem %s8, %s599
        %p601 = scmp.lt.s32.totalorder %s33, 3
        %s602 = scalar_select %p601, %s33, 3
        %s603 = scalar_lea.vmem %s9, %s602
        %p604 = scmp.lt.s32.totalorder %s33, 3
        %s605 = scalar_select %p604, %s33, 3
        %s606 = smul.addr %s605, 4
        %s607 = scalar_lea.vmem %s10, %s606
        %p609 = scmp.eq.s32.totalorder %s33, 0
        // Predicated region
        $region69: #{tpu_custom_call.1} parent=67 // pred_check
          %p610 = pneg %p609
        $region70: #{tpu_custom_call.1} parent=67 // pred_check_branch
          %612 = sbr.rel (%p610) target = $region72
        $region71: #{tpu_custom_call.1} parent=67 // pred_region
          %vm613 = vcmask 261120
          %614 = vst.msk [vmem:[#allocation2] sm:$0xff] %vm613, 0.0
        $region72: #{tpu_custom_call.1} parent=67 // pred_fallthru
          _
        %v615 = vld [vmem:[%s568] sm:$0xff]
        %v616 = vpack.c.bf16 %v615, %v615
        %v617 = vld [vmem:[%s572] sm:$0xff]
        %v618 = vpack.c.bf16 %v617, %v617
        %v619 = vld [vmem:[%s576] sm:$0xff]
        %v620 = vpack.c.bf16 %v619, %v619
        %v621 = vld [vmem:[%s584] sm:$0xf]
        %v622 = vld [vmem:[%s584 + $0x4] sm:$0xf]
        %v623 = vld [vmem:[%s584 + $0x8] sm:$0xf]
        %v624 = vld [vmem:[%s584 + $0xc] sm:$0xf]
        %v625 = vld [vmem:[%s587] sm:$0x1]
        %v627 = vperm.slane %v625, 0
        %v633 = vunpack.c.l.b16 %v621
        %v634 = vunpack.c.l.b16 %v622
        %v635 = vunpack.c.l.b16 %v623
        %v636 = vunpack.c.l.b16 %v624
        %v637 = vpack.c.b16 %v634, %v633
        %v638 = vpack.c.b16 %v636, %v635
        %vm641 = vcmask 261120
        %v643 = vsel %vm641, %v616, 0
        %645 = vmatpush.bf16.msra.mxu0 0
        %646 = vmatpush.bf16.msra.mxu0 0
        %647 = vmatpush.bf16.msra.mxu0 0
        %648 = vmatpush.bf16.msra.mxu0 0
        %649 = vmatpush.bf16.msra.mxu0 0
        %650 = vmatpush.bf16.msra.mxu0 0
        %651 = vmatpush.bf16.msra.mxu0 %v638
        %652 = vmatpush.bf16.msra.mxu0 %v637
        %653 = vmatmul.bf16.gmra.mxu0 %v643
        %v654 = vpop.f32.mrf.mxu0
        %v655 = vadd.f32 %v627, %v654
        %v656 = vpop.f32.mrf.mxu0
        %657 = vdwg.mxu0
        %v658 = vld [vmem:[%s592] sm:$0xf]
        %v659 = vld [vmem:[%s592 + $0x4] sm:$0xf]
        %v660 = vld [vmem:[%s592 + $0x8] sm:$0xf]
        %v661 = vld [vmem:[%s592 + $0xc] sm:$0xf]
        %v662 = vld [vmem:[%s595] sm:$0x1]
        %v664 = vperm.slane %v662, 0
        %v670 = vunpack.c.l.b16 %v658
        %v671 = vunpack.c.l.b16 %v659
        %v672 = vunpack.c.l.b16 %v660
        %v673 = vunpack.c.l.b16 %v661
        %v674 = vpack.c.b16 %v671, %v670
        %v675 = vpack.c.b16 %v673, %v672
        %v679 = vsel %vm641, %v618, 0
        %681 = vmatpush.bf16.msra.mxu0 0
        %682 = vmatpush.bf16.msra.mxu0 0
        %683 = vmatpush.bf16.msra.mxu0 0
        %684 = vmatpush.bf16.msra.mxu0 0
        %685 = vmatpush.bf16.msra.mxu0 0
        %686 = vmatpush.bf16.msra.mxu0 0
        %687 = vmatpush.bf16.msra.mxu0 %v675
        %688 = vmatpush.bf16.msra.mxu0 %v674
        %689 = vmatmul.bf16.gmra.mxu0 %v679
        %v690 = vpop.f32.mrf.mxu0
        %v691 = vadd.f32 %v664, %v690
        %v692 = vpop.f32.mrf.mxu0
        %693 = vdwg.mxu0
        %v694 = vld [vmem:[%s600] sm:$0xf]
        %v695 = vld [vmem:[%s600 + $0x4] sm:$0xf]
        %v696 = vld [vmem:[%s600 + $0x8] sm:$0xf]
        %v697 = vld [vmem:[%s600 + $0xc] sm:$0xf]
        %v698 = vld [vmem:[%s603] sm:$0x1]
        %v700 = vperm.slane %v698, 0
        %v706 = vunpack.c.l.b16 %v694
        %v707 = vunpack.c.l.b16 %v695
        %v708 = vunpack.c.l.b16 %v696
        %v709 = vunpack.c.l.b16 %v697
        %v710 = vpack.c.b16 %v707, %v706
        %v711 = vpack.c.b16 %v709, %v708
        %v715 = vsel %vm641, %v620, 0
        %717 = vmatpush.bf16.msra.mxu0 0
        %718 = vmatpush.bf16.msra.mxu0 0
        %719 = vmatpush.bf16.msra.mxu0 0
        %720 = vmatpush.bf16.msra.mxu0 0
        %721 = vmatpush.bf16.msra.mxu0 0
        %722 = vmatpush.bf16.msra.mxu0 0
        %723 = vmatpush.bf16.msra.mxu0 %v711
        %724 = vmatpush.bf16.msra.mxu0 %v710
        %725 = vmatmul.bf16.gmra.mxu0 %v715
        %v726 = vpop.f32.mrf.mxu0
        %v727 = vadd.f32 %v700, %v726
        %v728 = vpop.f32.mrf.mxu0
        %729 = vdwg.mxu0
        %v730 = vpack.c.bf16 %v655, %v655
        %v731 = vpack.c.bf16 %v691, %v691
        %vm732 = vcmask 64512
        %v734 = vsel %vm732, %v730, 0
        %v737 = vsel %vm732, %v731, 0
        %739 = vmatpush.bf16.xpose.msra.mxu0 0
        %740 = vmatpush.bf16.xpose.msra.mxu0 0
        %741 = vmatpush.bf16.xpose.msra.mxu0 0
        %742 = vmatpush.bf16.xpose.msra.mxu0 0
        %743 = vmatpush.bf16.xpose.msra.mxu0 0
        %744 = vmatpush.bf16.xpose.msra.mxu0 0
        %745 = vmatpush.bf16.xpose.msra.mxu0 0
        %746 = vmatpush.bf16.xpose.msra.mxu0 %v737
        %747 = vmatmul.bf16.gmra.mxu0 %v734
        %v748 = vpop.f32.mrf.mxu0
        %v749 = vadd.f32 0.0, %v748
        %v750 = vpop.f32.mrf.mxu0
        %751 = vdwg.mxu0
        %v752 = vmul.f32 %v749, 0.35355338
        %v753 = vld [vmem:[%s579] sm:$0x1]
        %vm754 = vcmp.eq.s32.totalorder %v753, 0
        %v755 = vsel %vm754, 1, 0
        %v756 = vperm.slane %v755, 0
        %vm757 = vcmp.eq.s32.totalorder %v756, 1
        %v758 = vsel %vm757, -3.4028235e+38, %v752
        %v759 = vsel %vm732, %v758, -inf
        %760 = vmax.xlane.f32.xlu0 %v759
        %v761 = vpop.xlane.xlu0 %760
        %v762 = vsub.f32 %v758, %v761
        %v763 = vmul.f32 %v762, 1.442695
        %v764 = vpow.pop %v763
        %v765 = vsel %vm732, %v764, 0.0
        %766 = vadd.xlane.f32.xlu0 %v765
        %v767 = vpop.xlane.xlu0 %766
        %v768 = vrcp.pop %v767
        %v769 = vmul.f32 %v764, %v768
        %v770 = vsel %vm757, 0.0, %v769
        %v771 = vpack.c.bf16 %v770, %v770
        %v772 = vpack.c.bf16 %v727, %v727
        %v774 = vsel %vm732, %v771, 0
        %vm776 = vcmask 1043456
        %v778 = vsel %vm776, %v772, 0
        %780 = vmatpush.bf16.msra.mxu0 0
        %781 = vmatpush.bf16.msra.mxu0 0
        %782 = vmatpush.bf16.msra.mxu0 0
        %783 = vmatpush.bf16.msra.mxu0 0
        %784 = vmatpush.bf16.msra.mxu0 0
        %785 = vmatpush.bf16.msra.mxu0 0
        %786 = vmatpush.bf16.msra.mxu0 0
        %787 = vmatpush.bf16.msra.mxu0 %v778
        %788 = vmatmul.bf16.gmra.mxu0 %v774
        %v789 = vpop.f32.mrf.mxu0
        %v790 = vadd.f32 0.0, %v789
        %v791 = vpop.f32.mrf.mxu0
        %792 = vdwg.mxu0
        %v793 = vld [vmem:[#allocation2] sm:$0xff]
        %v794 = vpack.c.bf16 %v790, %v790
        %v795 = vld [vmem:[%s607] sm:$0xf]
        %v797 = vsel %vm732, %v794, 0
        %v800 = vsel %vm776, %v795, 0
        %802 = vmatpush.bf16.msra.mxu0 0
        %803 = vmatpush.bf16.msra.mxu0 0
        %804 = vmatpush.bf16.msra.mxu0 0
        %805 = vmatpush.bf16.msra.mxu0 0
        %806 = vmatpush.bf16.msra.mxu0 0
        %807 = vmatpush.bf16.msra.mxu0 0
        %808 = vmatpush.bf16.msra.mxu0 0
        %809 = vmatpush.bf16.msra.mxu0 %v800
        %810 = vmatmul.bf16.gmra.mxu0 %v797
        %v811 = vpop.f32.mrf.mxu0
        %v812 = vadd.f32 0.0, %v811
        %v813 = vpop.f32.mrf.mxu0
        %814 = vdwg.mxu0
        %v815 = vadd.f32 %v793, %v812
        %816 = vst.msk [vmem:[#allocation2] sm:$0xff] %vm641, %v815
        %p817 = scmp.eq.s32.totalorder %s33, 3
        // Predicated region
        $region73: #{tpu_custom_call.1} parent=67 // pred_check
          %p818 = pneg %p817
        $region74: #{tpu_custom_call.1} parent=67 // pred_check_branch
          %820 = sbr.rel (%p818) target = $region76
        $region75: #{tpu_custom_call.1} parent=67 // pred_region
          %v821 = vld [vmem:[#allocation2] sm:$0xff]
          %v822 = vld [vmem:[%s11] sm:$0x1]
          %v824 = vperm.slane %v822, 0
          %v826 = vadd.f32 %v821, %v824
          %827 = vst.msk [vmem:[%s561] sm:$0xff] %vm641, %v826
        $region76: #{tpu_custom_call.1} parent=67 // pred_fallthru
          _
        %s828 = sand.u32 %s364, 1
        %s829 = scalar_lea.sflag [#allocation4], %s828
        %s830 = sand.u32 %s364, 1
        %s831 = smul.addr %s830, 8
        %s832 = scalar_lea.vmem [#allocation3], %s831
        // Predicated region
        $region77: #{tpu_custom_call.1} parent=67 // pred_check
          %p833 = pneg %p374
        $region78: #{tpu_custom_call.1} parent=67 // pred_check_branch
          %835 = sbr.rel (%p833) target = $region80
        $region79: #{tpu_custom_call.1} parent=67 // pred_region
          %837 = vsyncadd %s829, 0
          %s838 = sadd.s32 %s32, %s31
          %s839 = smul.addr %s838, 8
          %s840 = scalar_lea.hbm %s12, %s839
          %s842 = sshll.u32 %s832, 4
          %s843 = int_to_ptr.vmem [resolvable:$true] %s842
          %s844 = sshll.u32 %s840, 4
          %s845 = int_to_ptr.hbm [resolvable:$true] %s844
          %847 = dma.vmem_to_hbm [thread:$0]  %s843, 128, %s845, %s829
        $region80: #{tpu_custom_call.1} parent=67 // pred_fallthru
          _
      $region68: #{tpu_custom_call.1} parent=5 // pred_fallthru
        _
      %p848 = scmp.le.s32.totalorder 2, %s21
      // Predicated region
      $region81: #{tpu_custom_call.1} parent=5 // pred_check
        %p849 = pneg %p848
      $region82: #{tpu_custom_call.1} parent=5 // pred_check_branch
        %851 = sbr.rel (%p849) target = $region84
      $region83: #{tpu_custom_call.1} parent=5 // pred_region
        %s852 = ssub.s32 %s21, 2
        // Predicated region
        $region85: #{tpu_custom_call.1} parent=83 // pred_check
          %p853 = pneg %p380
        $region86: #{tpu_custom_call.1} parent=83 // pred_check_branch
          %855 = sbr.rel (%p853) target = $region88
        $region87: #{tpu_custom_call.1} parent=83 // pred_region
          %s856 = sand.u32 %s365, 1
          %s857 = scalar_lea.sflag [#allocation4], %s856
          %s858 = sand.u32 %s365, 1
          %s859 = smul.addr %s858, 8
          %s860 = scalar_lea.vmem [#allocation3], %s859
          %862 = dma.done %s857, 128
        $region88: #{tpu_custom_call.1} parent=83 // pred_fallthru
          _
      $region84: #{tpu_custom_call.1} parent=5 // pred_fallthru
        _
    $region6: #{tpu_custom_call.1} parent=1 // loop_footer
      %s25 = sadd.s32 1, %s21
    $region7: #{tpu_custom_call.1} parent=1 // loop_footer_branch
      %20 = sbr.rel target = $region3
    $region8: #{tpu_custom_call.1} parent=1 // loop_exit
      _
    %863 = vsyncpa [#allocation4], 1
    %s864 = scalar_lea.sflag [#allocation4], 1
    %865 = vsyncpa %s864, 1

</llo_original>
